<compile_context>
chip_gen: v6e
topology: v6e:2x2x1
jax: 0.10.0
libtpu: 0.0.40
codegen_flags: <defaults>
</compile_context>

<pallas_src>
import jax
import jax.numpy as jnp
from jax import lax
from jax.experimental import pallas as pl
from jax.experimental.pallas import tpu as pltpu


def _round_up(x, m):
    return ((x + m - 1) // m) * m


def gmf_kernel(u_idx_ref, i_idx_ref, u_tab_ref, i_tab_ref, o_ref):
    """One grid step computes a (TB, E) tile of the output.

    u_idx_ref, i_idx_ref : (B_pad,) int32 in SMEM (scalar prefetch)
    u_tab_ref            : (num_users, E) float32, VMEM-resident
    i_tab_ref            : (num_items, E) float32, VMEM-resident
    o_ref                : (TB, E) float32 output tile
    """
    tb = o_ref.shape[0]
    base = pl.program_id(0) * tb

    def body(r, carry):
        u_row = u_tab_ref[pl.ds(u_idx_ref[base + r], 1), :]   # (1, E)
        i_row = i_tab_ref[pl.ds(i_idx_ref[base + r], 1), :]   # (1, E)
        o_ref[pl.ds(r, 1), :] = u_row * i_row
        return carry

    # TB is always a multiple of 8; modest unroll gives the LLO scheduler
    # visibility (co-issues the SMEM index reads / vld / vmul / vst slots)
    # without blowing up code size.
    lax.fori_loop(0, tb, body, 0, unroll=8)


def gmf_forward(user_table, item_table, user_indices, item_indices, *, max_tb=1024):
    """Pallas GMF forward.

    user_table : (num_users, E) float32
    item_table : (num_items, E) float32
    user_indices, item_indices : (B,) int32
    returns    : (B, E) float32
    """
    B = user_indices.shape[0]
    num_users, E = user_table.shape
    num_items, _ = item_table.shape

    # Batch tile: multiple of 8 (sublane-aligned).  Batches up to `max_tb`
    # rows run as a single grid step; larger batches tile by `max_tb`.
    assert max_tb % 8 == 0
    tb = min(max_tb, _round_up(B, 8))
    b_pad = _round_up(B, tb)

    u_idx = jnp.asarray(user_indices, jnp.int32)
    i_idx = jnp.asarray(item_indices, jnp.int32)
    if b_pad != B:
        pad = b_pad - B
        u_idx = jnp.pad(u_idx, (0, pad))   # index 0 is always valid
        i_idx = jnp.pad(i_idx, (0, pad))

    grid_spec = pltpu.PrefetchScalarGridSpec(
        num_scalar_prefetch=2,            # user_indices, item_indices -> SMEM
        grid=(b_pad // tb,),
        in_specs=[
            # Full tables resident in VMEM across all grid steps (constant
            # block index => fetched once, never re-DMA'd).
            pl.BlockSpec((num_users, E), lambda b, u, i: (0, 0)),
            pl.BlockSpec((num_items, E), lambda b, u, i: (0, 0)),
        ],
        out_specs=pl.BlockSpec((tb, E), lambda b, u, i: (b, 0)),
    )

    out = pl.pallas_call(
        gmf_kernel,
        grid_spec=grid_spec,
        out_shape=jax.ShapeDtypeStruct((b_pad, E), user_table.dtype),
        compiler_params=pltpu.CompilerParams(
            dimension_semantics=("parallel",),   # independent batch tiles
        ),
    )(u_idx, i_idx, user_table, item_table)

    return out[:B] if b_pad != B else out


if __name__ == "__main__":
    num_users = 50
    num_items = 2079
    embedding_size = 32
    batch = 8

    key = jax.random.PRNGKey(0)
    k_u, k_i, k_ui, k_ii = jax.random.split(key, 4)

    # nn.Embedding default init: N(0, 1)
    user_table = jax.random.normal(k_u, (num_users, embedding_size), jnp.float32)
    item_table = jax.random.normal(k_i, (num_items, embedding_size), jnp.float32)

    user_indices = jax.random.randint(k_ui, (batch,), 0, num_users, jnp.int32)
    item_indices = jax.random.randint(k_ii, (batch,), 0, num_items, jnp.int32)

    out = gmf_forward(user_table, item_table, user_indices, item_indices)
    out = jax.block_until_ready(out)

    ref = user_table[user_indices] * item_table[item_indices]
    assert out.shape == (batch, embedding_size)
    assert jnp.allclose(out, ref, atol=1e-6), "mismatch vs reference (small batch)"

    # Second check: exercises the multi-step grid (tb=1024, 3 steps) and the
    # tail-padding / output-slicing path.
    batch2 = 2600
    k_ui2, k_ii2 = jax.random.split(jax.random.PRNGKey(1), 2)
    ui2 = jax.random.randint(k_ui2, (batch2,), 0, num_users, jnp.int32)
    ii2 = jax.random.randint(k_ii2, (batch2,), 0, num_items, jnp.int32)
    out2 = jax.block_until_ready(gmf_forward(user_table, item_table, ui2, ii2))
    ref2 = user_table[ui2] * item_table[ii2]
    assert out2.shape == (batch2, embedding_size)
    assert jnp.allclose(out2, ref2, atol=1e-6), "mismatch vs reference (tiled batch)"

    print("KERNEL_OK")
</pallas_src>

<mosaic_0001>
module attributes {stable_mosaic.version = 11 : i64} {
  func.func @gmf_kernel(%arg0: i32, %arg1: memref<8xi32, #tpu.memory_space<smem>>, %arg2: memref<8xi32, #tpu.memory_space<smem>>, %arg3: memref<50x32xf32, #tpu.memory_space<vmem>>, %arg4: memref<2079x32xf32, #tpu.memory_space<vmem>>, %arg5: memref<8x32xf32, #tpu.memory_space<vmem>>) attributes {dimension_semantics = [#tpu.dimension_semantics<parallel>], iteration_bounds = array<i64: 1>, scalar_prefetch = 2 : i64, scratch_operands = 0 : i64, tpu.core_type = #tpu.core_type<tc>, window_params = [{pipeline_mode = #tpu.pipeline_mode<synchronous>, transform_indices = @transform_0, window_bounds = array<i64: 50, 32>}, {pipeline_mode = #tpu.pipeline_mode<synchronous>, transform_indices = @transform_1, window_bounds = array<i64: 2079, 32>}, {transform_indices = @transform_2, window_bounds = array<i64: 8, 32>}]} {
    %c8_i32 = arith.constant 8 : i32
    %0 = arith.muli %arg0, %c8_i32 : i32
    %c0_i32 = arith.constant 0 : i32
    %1 = arith.addi %0, %c0_i32 : i32
    %2 = arith.index_cast %1 : i32 to index
    %3 = memref.load %arg1[%2] : memref<8xi32, #tpu.memory_space<smem>>
    %4 = arith.index_cast %3 : i32 to index
    %c0 = arith.constant 0 : index
    %5 = vector.load %arg3[%4, %c0] : memref<50x32xf32, #tpu.memory_space<vmem>>, vector<1x32xf32>
    %6 = arith.addi %0, %c0_i32 : i32
    %7 = arith.index_cast %6 : i32 to index
    %8 = memref.load %arg2[%7] : memref<8xi32, #tpu.memory_space<smem>>
    %9 = arith.index_cast %8 : i32 to index
    %c0_0 = arith.constant 0 : index
    %10 = vector.load %arg4[%9, %c0_0] : memref<2079x32xf32, #tpu.memory_space<vmem>>, vector<1x32xf32>
    %11 = arith.mulf %5, %10 : vector<1x32xf32>
    %12 = arith.index_cast %c0_i32 : i32 to index
    %c0_1 = arith.constant 0 : index
    %13 = vector.load %arg5[%12, %c0_1] : memref<8x32xf32, #tpu.memory_space<vmem>>, vector<1x32xf32>
    tpu.vector_store %arg5[%12, %c0_1], %11 {strides = array<i32>} : memref<8x32xf32, #tpu.memory_space<vmem>>, vector<1x32xf32>,
    %c1_i32 = arith.constant 1 : i32
    %14 = arith.addi %0, %c1_i32 : i32
    %15 = arith.index_cast %14 : i32 to index
    %16 = memref.load %arg1[%15] : memref<8xi32, #tpu.memory_space<smem>>
    %17 = arith.index_cast %16 : i32 to index
    %c0_2 = arith.constant 0 : index
    %18 = vector.load %arg3[%17, %c0_2] : memref<50x32xf32, #tpu.memory_space<vmem>>, vector<1x32xf32>
    %19 = arith.addi %0, %c1_i32 : i32
    %20 = arith.index_cast %19 : i32 to index
    %21 = memref.load %arg2[%20] : memref<8xi32, #tpu.memory_space<smem>>
    %22 = arith.index_cast %21 : i32 to index
    %c0_3 = arith.constant 0 : index
    %23 = vector.load %arg4[%22, %c0_3] : memref<2079x32xf32, #tpu.memory_space<vmem>>, vector<1x32xf32>
    %24 = arith.mulf %18, %23 : vector<1x32xf32>
    %25 = arith.index_cast %c1_i32 : i32 to index
    %c0_4 = arith.constant 0 : index
    %26 = vector.load %arg5[%25, %c0_4] : memref<8x32xf32, #tpu.memory_space<vmem>>, vector<1x32xf32>
    tpu.vector_store %arg5[%25, %c0_4], %24 {strides = array<i32>} : memref<8x32xf32, #tpu.memory_space<vmem>>, vector<1x32xf32>,
    %c2_i32 = arith.constant 2 : i32
    %27 = arith.addi %0, %c2_i32 : i32
    %28 = arith.index_cast %27 : i32 to index
    %29 = memref.load %arg1[%28] : memref<8xi32, #tpu.memory_space<smem>>
    %30 = arith.index_cast %29 : i32 to index
    %c0_5 = arith.constant 0 : index
    %31 = vector.load %arg3[%30, %c0_5] : memref<50x32xf32, #tpu.memory_space<vmem>>, vector<1x32xf32>
    %32 = arith.addi %0, %c2_i32 : i32
    %33 = arith.index_cast %32 : i32 to index
    %34 = memref.load %arg2[%33] : memref<8xi32, #tpu.memory_space<smem>>
    %35 = arith.index_cast %34 : i32 to index
    %c0_6 = arith.constant 0 : index
    %36 = vector.load %arg4[%35, %c0_6] : memref<2079x32xf32, #tpu.memory_space<vmem>>, vector<1x32xf32>
    %37 = arith.mulf %31, %36 : vector<1x32xf32>
    %38 = arith.index_cast %c2_i32 : i32 to index
    %c0_7 = arith.constant 0 : index
    %39 = vector.load %arg5[%38, %c0_7] : memref<8x32xf32, #tpu.memory_space<vmem>>, vector<1x32xf32>
    tpu.vector_store %arg5[%38, %c0_7], %37 {strides = array<i32>} : memref<8x32xf32, #tpu.memory_space<vmem>>, vector<1x32xf32>,
    %c3_i32 = arith.constant 3 : i32
    %40 = arith.addi %0, %c3_i32 : i32
    %41 = arith.index_cast %40 : i32 to index
    %42 = memref.load %arg1[%41] : memref<8xi32, #tpu.memory_space<smem>>
    %43 = arith.index_cast %42 : i32 to index
    %c0_8 = arith.constant 0 : index
    %44 = vector.load %arg3[%43, %c0_8] : memref<50x32xf32, #tpu.memory_space<vmem>>, vector<1x32xf32>
    %45 = arith.addi %0, %c3_i32 : i32
    %46 = arith.index_cast %45 : i32 to index
    %47 = memref.load %arg2[%46] : memref<8xi32, #tpu.memory_space<smem>>
    %48 = arith.index_cast %47 : i32 to index
    %c0_9 = arith.constant 0 : index
    %49 = vector.load %arg4[%48, %c0_9] : memref<2079x32xf32, #tpu.memory_space<vmem>>, vector<1x32xf32>
    %50 = arith.mulf %44, %49 : vector<1x32xf32>
    %51 = arith.index_cast %c3_i32 : i32 to index
    %c0_10 = arith.constant 0 : index
    %52 = vector.load %arg5[%51, %c0_10] : memref<8x32xf32, #tpu.memory_space<vmem>>, vector<1x32xf32>
    tpu.vector_store %arg5[%51, %c0_10], %50 {strides = array<i32>} : memref<8x32xf32, #tpu.memory_space<vmem>>, vector<1x32xf32>,
    %c4_i32 = arith.constant 4 : i32
    %53 = arith.addi %0, %c4_i32 : i32
    %54 = arith.index_cast %53 : i32 to index
    %55 = memref.load %arg1[%54] : memref<8xi32, #tpu.memory_space<smem>>
    %56 = arith.index_cast %55 : i32 to index
    %c0_11 = arith.constant 0 : index
    %57 = vector.load %arg3[%56, %c0_11] : memref<50x32xf32, #tpu.memory_space<vmem>>, vector<1x32xf32>
    %58 = arith.addi %0, %c4_i32 : i32
    %59 = arith.index_cast %58 : i32 to index
    %60 = memref.load %arg2[%59] : memref<8xi32, #tpu.memory_space<smem>>
    %61 = arith.index_cast %60 : i32 to index
    %c0_12 = arith.constant 0 : index
    %62 = vector.load %arg4[%61, %c0_12] : memref<2079x32xf32, #tpu.memory_space<vmem>>, vector<1x32xf32>
    %63 = arith.mulf %57, %62 : vector<1x32xf32>
    %64 = arith.index_cast %c4_i32 : i32 to index
    %c0_13 = arith.constant 0 : index
    %65 = vector.load %arg5[%64, %c0_13] : memref<8x32xf32, #tpu.memory_space<vmem>>, vector<1x32xf32>
    tpu.vector_store %arg5[%64, %c0_13], %63 {strides = array<i32>} : memref<8x32xf32, #tpu.memory_space<vmem>>, vector<1x32xf32>,
    %c5_i32 = arith.constant 5 : i32
    %66 = arith.addi %0, %c5_i32 : i32
    %67 = arith.index_cast %66 : i32 to index
    %68 = memref.load %arg1[%67] : memref<8xi32, #tpu.memory_space<smem>>
    %69 = arith.index_cast %68 : i32 to index
    %c0_14 = arith.constant 0 : index
    %70 = vector.load %arg3[%69, %c0_14] : memref<50x32xf32, #tpu.memory_space<vmem>>, vector<1x32xf32>
    %71 = arith.addi %0, %c5_i32 : i32
    %72 = arith.index_cast %71 : i32 to index
    %73 = memref.load %arg2[%72] : memref<8xi32, #tpu.memory_space<smem>>
    %74 = arith.index_cast %73 : i32 to index
    %c0_15 = arith.constant 0 : index
    %75 = vector.load %arg4[%74, %c0_15] : memref<2079x32xf32, #tpu.memory_space<vmem>>, vector<1x32xf32>
    %76 = arith.mulf %70, %75 : vector<1x32xf32>
    %77 = arith.index_cast %c5_i32 : i32 to index
    %c0_16 = arith.constant 0 : index
    %78 = vector.load %arg5[%77, %c0_16] : memref<8x32xf32, #tpu.memory_space<vmem>>, vector<1x32xf32>
    tpu.vector_store %arg5[%77, %c0_16], %76 {strides = array<i32>} : memref<8x32xf32, #tpu.memory_space<vmem>>, vector<1x32xf32>,
    %c6_i32 = arith.constant 6 : i32
    %79 = arith.addi %0, %c6_i32 : i32
    %80 = arith.index_cast %79 : i32 to index
    %81 = memref.load %arg1[%80] : memref<8xi32, #tpu.memory_space<smem>>
    %82 = arith.index_cast %81 : i32 to index
    %c0_17 = arith.constant 0 : index
    %83 = vector.load %arg3[%82, %c0_17] : memref<50x32xf32, #tpu.memory_space<vmem>>, vector<1x32xf32>
    %84 = arith.addi %0, %c6_i32 : i32
    %85 = arith.index_cast %84 : i32 to index
    %86 = memref.load %arg2[%85] : memref<8xi32, #tpu.memory_space<smem>>
    %87 = arith.index_cast %86 : i32 to index
    %c0_18 = arith.constant 0 : index
    %88 = vector.load %arg4[%87, %c0_18] : memref<2079x32xf32, #tpu.memory_space<vmem>>, vector<1x32xf32>
    %89 = arith.mulf %83, %88 : vector<1x32xf32>
    %90 = arith.index_cast %c6_i32 : i32 to index
    %c0_19 = arith.constant 0 : index
    %91 = vector.load %arg5[%90, %c0_19] : memref<8x32xf32, #tpu.memory_space<vmem>>, vector<1x32xf32>
    tpu.vector_store %arg5[%90, %c0_19], %89 {strides = array<i32>} : memref<8x32xf32, #tpu.memory_space<vmem>>, vector<1x32xf32>,
    %c7_i32 = arith.constant 7 : i32
    %92 = arith.addi %0, %c7_i32 : i32
    %93 = arith.index_cast %92 : i32 to index
    %94 = memref.load %arg1[%93] : memref<8xi32, #tpu.memory_space<smem>>
    %95 = arith.index_cast %94 : i32 to index
    %c0_20 = arith.constant 0 : index
    %96 = vector.load %arg3[%95, %c0_20] : memref<50x32xf32, #tpu.memory_space<vmem>>, vector<1x32xf32>
    %97 = arith.addi %0, %c7_i32 : i32
    %98 = arith.index_cast %97 : i32 to index
    %99 = memref.load %arg2[%98] : memref<8xi32, #tpu.memory_space<smem>>
    %100 = arith.index_cast %99 : i32 to index
    %c0_21 = arith.constant 0 : index
    %101 = vector.load %arg4[%100, %c0_21] : memref<2079x32xf32, #tpu.memory_space<vmem>>, vector<1x32xf32>
    %102 = arith.mulf %96, %101 : vector<1x32xf32>
    %103 = arith.index_cast %c7_i32 : i32 to index
    %c0_22 = arith.constant 0 : index
    %104 = vector.load %arg5[%103, %c0_22] : memref<8x32xf32, #tpu.memory_space<vmem>>, vector<1x32xf32>
    tpu.vector_store %arg5[%103, %c0_22], %102 {strides = array<i32>} : memref<8x32xf32, #tpu.memory_space<vmem>>, vector<1x32xf32>,
    %c8_i32_23 = arith.constant 8 : i32
    return
  }
  func.func @transform_0(%arg0: i32, %arg1: memref<8xi32, #tpu.memory_space<smem>>, %arg2: memref<8xi32, #tpu.memory_space<smem>>) -> (i32, i32) {
    %c0_i32 = arith.constant 0 : i32
    %c0_i32_0 = arith.constant 0 : i32
    %c0_i32_1 = arith.constant 0 : i32
    return %c0_i32, %c0_i32_0 : i32, i32
  }
  func.func @transform_1(%arg0: i32, %arg1: memref<8xi32, #tpu.memory_space<smem>>, %arg2: memref<8xi32, #tpu.memory_space<smem>>) -> (i32, i32) {
    %c0_i32 = arith.constant 0 : i32
    %c0_i32_0 = arith.constant 0 : i32
    %c0_i32_1 = arith.constant 0 : i32
    return %c0_i32, %c0_i32_0 : i32, i32
  }
  func.func @transform_2(%arg0: i32, %arg1: memref<8xi32, #tpu.memory_space<smem>>, %arg2: memref<8xi32, #tpu.memory_space<smem>>) -> (i32, i32) {
    %c0_i32 = arith.constant 0 : i32
    %c0_i32_0 = arith.constant 0 : i32
    return %arg0, %c0_i32 : i32, i32
  }
}

</mosaic_0001>

<llo_original>
// kernel: tpu_custom_call.1
$region0: #{tpu_custom_call.1}
  #allocation0 [shape = 'u32[]', space=smem, size = 0x4, offset = 0x4, fixed_abs, tag = 'smem constant byte address 0x4 - core index']
  #allocation1 [shape = 'u32[144,128]{1,0:T(1,128)}', space=vmem, size = 0x12000, scoped, tag = 'internal scratch']
  #allocation2 [shape = 's32[1]{0}', space=sflag, size = 0x4, scoped, tag = 'scoped memory for tpu_custom_call.1']
  #allocation3 [shape = 'u8[512]{0}', space=smem, size = 0x200, scoped, tag = 'prefetched SMEM operand 0']
  #allocation4 [shape = 'u8[512]{0}', space=smem, size = 0x200, scoped, tag = 'prefetched SMEM operand 1']
  %s0 = inlined_call_operand.vmem [shape: s32[8], index: 0, kind: input, shape index: {}]
  %s1 = inlined_call_operand.vmem [shape: s32[8], index: 1, kind: input, shape index: {}]
  %s2 = inlined_call_operand.vmem [shape: f32[50,32], index: 2, kind: input, shape index: {}]
  %s3 = inlined_call_operand.vmem [shape: f32[2079,32], index: 3, kind: input, shape index: {}]
  %s4 = inlined_call_operand.hbm [shape: f32[8,32], index: 4, kind: output, shape index: {}]
  %s5 = sld [smem:[#allocation0]]
  $region18: #{tpu_custom_call.1} parent=0
    _
  %s7 = ssub.s32 1, %s5
  %s8 = scalar_select 0, %s7, %s5
  %s9 = sshll.u32 %s0, 4
  %s10 = int_to_ptr.vmem [resolvable:$true] %s9
  %12 = dma.vmem_to_smem %s10, 16, [#allocation3], [#allocation2]
  %s13 = sshll.u32 %s1, 4
  %s14 = int_to_ptr.vmem [resolvable:$true] %s13
  %16 = dma.vmem_to_smem %s14, 16, [#allocation4], [#allocation2]
  %17 = dma.done [#allocation2], 32
  %18 = sfence
  $region1: #{tpu_custom_call.1} parent=0
    #allocation5 [shape = 'u8[4096]{0}', space=vmem, size = 0x1000, scoped, tag = 'output window, operand 0, single buffered']
    #allocation6 [shape = 's32[1]{0}', space=sflag, size = 0x4, scoped, tag = 'scoped memory for tpu_custom_call.1']
    %19 = vsyncpa [#allocation6], 0
    // Predicated region
    $region2: #{tpu_custom_call.1} parent=1 // pred_check
      _
    $region3: #{tpu_custom_call.1} parent=1 // pred_check_branch
      %21 = sbr.rel (0) target = $region5
    $region4: #{tpu_custom_call.1} parent=1 // pred_region
      _
    $region5: #{tpu_custom_call.1} parent=1 // pred_fallthru
      _
    // Predicated region
    $region6: #{tpu_custom_call.1} parent=1 // pred_check
      _
    $region7: #{tpu_custom_call.1} parent=1 // pred_check_branch
      %23 = sbr.rel (0) target = $region9
    $region8: #{tpu_custom_call.1} parent=1 // pred_region
      _
    $region9: #{tpu_custom_call.1} parent=1 // pred_fallthru
      _
    %s24 = smul.u32 0, 8
    %s25 = sld [smem:[#allocation3 + %s24]]
    %s26 = scalar_lea.vmem %s2, %s25
    %v27 = vld [vmem:[%s26] sm:$0x1]
    %s28 = sld [smem:[#allocation4 + %s24]]
    %s29 = scalar_lea.vmem %s3, %s28
    %v30 = vld [vmem:[%s29] sm:$0x1]
    %v31 = vmul.f32 %v27, %v30
    %vm32 = vcmask 253952
    %33 = vst.msk [vmem:[#allocation5] sm:$0x1] %vm32, %v31
    %s34 = sadd.s32 %s24, 1
    %s35 = sld [smem:[#allocation3 + %s34]]
    %s36 = scalar_lea.vmem %s2, %s35
    %v37 = vld [vmem:[%s36] sm:$0x1]
    %s38 = sld [smem:[#allocation4 + %s34]]
    %s39 = scalar_lea.vmem %s3, %s38
    %v40 = vld [vmem:[%s39] sm:$0x1]
    %v41 = vmul.f32 %v37, %v40
    %42 = vst.msk [vmem:[#allocation5 + $0x1] sm:$0x1] %vm32, %v41
    %s43 = sadd.s32 %s24, 2
    %s44 = sld [smem:[#allocation3 + %s43]]
    %s45 = scalar_lea.vmem %s2, %s44
    %v46 = vld [vmem:[%s45] sm:$0x1]
    %s47 = sld [smem:[#allocation4 + %s43]]
    %s48 = scalar_lea.vmem %s3, %s47
    %v49 = vld [vmem:[%s48] sm:$0x1]
    %v50 = vmul.f32 %v46, %v49
    %51 = vst.msk [vmem:[#allocation5 + $0x2] sm:$0x1] %vm32, %v50
    %s52 = sadd.s32 %s24, 3
    %s53 = sld [smem:[#allocation3 + %s52]]
    %s54 = scalar_lea.vmem %s2, %s53
    %v55 = vld [vmem:[%s54] sm:$0x1]
    %s56 = sld [smem:[#allocation4 + %s52]]
    %s57 = scalar_lea.vmem %s3, %s56
    %v58 = vld [vmem:[%s57] sm:$0x1]
    %v59 = vmul.f32 %v55, %v58
    %60 = vst.msk [vmem:[#allocation5 + $0x3] sm:$0x1] %vm32, %v59
    %s61 = sadd.s32 %s24, 4
    %s62 = sld [smem:[#allocation3 + %s61]]
    %s63 = scalar_lea.vmem %s2, %s62
    %v64 = vld [vmem:[%s63] sm:$0x1]
    %s65 = sld [smem:[#allocation4 + %s61]]
    %s66 = scalar_lea.vmem %s3, %s65
    %v67 = vld [vmem:[%s66] sm:$0x1]
    %v68 = vmul.f32 %v64, %v67
    %69 = vst.msk [vmem:[#allocation5 + $0x4] sm:$0x1] %vm32, %v68
    %s70 = sadd.s32 %s24, 5
    %s71 = sld [smem:[#allocation3 + %s70]]
    %s72 = scalar_lea.vmem %s2, %s71
    %v73 = vld [vmem:[%s72] sm:$0x1]
    %s74 = sld [smem:[#allocation4 + %s70]]
    %s75 = scalar_lea.vmem %s3, %s74
    %v76 = vld [vmem:[%s75] sm:$0x1]
    %v77 = vmul.f32 %v73, %v76
    %78 = vst.msk [vmem:[#allocation5 + $0x5] sm:$0x1] %vm32, %v77
    %s79 = sadd.s32 %s24, 6
    %s80 = sld [smem:[#allocation3 + %s79]]
    %s81 = scalar_lea.vmem %s2, %s80
    %v82 = vld [vmem:[%s81] sm:$0x1]
    %s83 = sld [smem:[#allocation4 + %s79]]
    %s84 = scalar_lea.vmem %s3, %s83
    %v85 = vld [vmem:[%s84] sm:$0x1]
    %v86 = vmul.f32 %v82, %v85
    %87 = vst.msk [vmem:[#allocation5 + $0x6] sm:$0x1] %vm32, %v86
    %s88 = sadd.s32 %s24, 7
    %s89 = sld [smem:[#allocation3 + %s88]]
    %s90 = scalar_lea.vmem %s2, %s89
    %v91 = vld [vmem:[%s90] sm:$0x1]
    %s92 = sld [smem:[#allocation4 + %s88]]
    %s93 = scalar_lea.vmem %s3, %s92
    %v94 = vld [vmem:[%s93] sm:$0x1]
    %v95 = vmul.f32 %v91, %v94
    %96 = vst.msk [vmem:[#allocation5 + $0x7] sm:$0x1] %vm32, %v95
    // Predicated region
    $region10: #{tpu_custom_call.1} parent=1 // pred_check
      _
    $region11: #{tpu_custom_call.1} parent=1 // pred_check_branch
      %98 = sbr.rel (0) target = $region13
    $region12: #{tpu_custom_call.1} parent=1 // pred_region
      %s100 = ssub.s32 128, 128
      %101 = vsyncadd [#allocation6], %s100
      %s103 = sshll.u32 [#allocation5], 4
      %s104 = int_to_ptr.vmem [resolvable:$true] %s103
      %106 = dma.vmem_to_hbm [thread:$0]  %s104, 128, %s4, [#allocation6]
    $region13: #{tpu_custom_call.1} parent=1 // pred_fallthru
      _
    // Predicated region
    $region14: #{tpu_custom_call.1} parent=1 // pred_check
      _
    $region15: #{tpu_custom_call.1} parent=1 // pred_check_branch
      %108 = sbr.rel (0) target = $region17
    $region16: #{tpu_custom_call.1} parent=1 // pred_region
      %109 = dma.done [#allocation6], 128
    $region17: #{tpu_custom_call.1} parent=1 // pred_fallthru
      _
    %110 = vsyncpa [#allocation6], 1

</llo_original>
